<compile_context>
chip_gen: v7x
topology: tpu7x:2x2x1
jax: 0.10.0
libtpu: 0.0.40
codegen_flags: <defaults>
</compile_context>

<pallas_src>
import jax
import jax.numpy as jnp
from jax import lax
from jax.experimental import pallas as pl
from jax.experimental.pallas import tpu as pltpu

LOSS_ALPHA = 0.7  # Config.loss_alpha


def _make_kernel(n, d, k_total, tk, chunk, npc, num_cores):
    nk = pl.cdiv(k_total, tk)
    num_chunks = tk // chunk
    assert num_chunks * chunk == tk, (tk, chunk)
    # Mask is compiled out when the core-split tile range exactly covers K.
    needs_mask = (num_cores * npc * tk) != k_total

    def kernel(temp_ref, online_ref, mom_ref, queue_ref, lse_ref, pos_ref,
               m_scr, s_scr):
        c = pl.program_id(0)          # core-split axis ("parallel")
        k = pl.program_id(1)          # K reduction axis ("arbitrary")
        inv_t = 1.0 / temp_ref[0, 0]

        @pl.when(k == 0)
        def _init():
            m_scr[...] = jnp.full((n, 1), -jnp.inf, dtype=jnp.float32)
            s_scr[...] = jnp.zeros((n, 1), dtype=jnp.float32)

        online_tile = online_ref[...]          # [N, D], native dtype (bf16 ok)
        tile_idx = c * npc + k                 # logical (unclamped) tile index
        base_col = tile_idx * tk

        def body(ci, carry):
            m_prev, s_prev = carry
            start = pl.multiple_of(ci * chunk, chunk)
            q_blk = queue_ref[:, pl.ds(start, chunk)]            # [D, chunk]
            # MXU matmul in native dtype, f32 accumulation.
            neg = jnp.dot(online_tile, q_blk,
                          preferred_element_type=jnp.float32) * inv_t
            if needs_mask:
                col = (jax.lax.broadcasted_iota(jnp.int32, (n, chunk), 1)
                       + base_col + start)
                neg = jnp.where(col < k_total, neg, -jnp.inf)
            # Streaming log-sum-exp update over this chunk.
            m_new = jnp.maximum(m_prev, jnp.max(neg, axis=-1, keepdims=True))
            s_new = (s_prev * jnp.exp(m_prev - m_new)
                     + jnp.sum(jnp.exp(neg - m_new), axis=-1, keepdims=True))
            return m_new, s_new

        m_fin, s_fin = lax.fori_loop(0, num_chunks, body,
                                     (m_scr[...], s_scr[...]), unroll=True)
        m_scr[...] = m_fin
        s_scr[...] = s_fin

        @pl.when(k == npc - 1)
        def _finalize():
            # Positive logit (einsum 'nd,nd->n'), tiny [N,D] f32 on the VPU.
            # Recomputed per core (redundant but negligible) so each core's
            # outputs are self-contained.
            of32 = online_tile.astype(jnp.float32)
            mf32 = mom_ref[...].astype(jnp.float32)
            pos = jnp.sum(of32 * mf32, axis=-1, keepdims=True) * inv_t
            pos_ref[0] = pos
            lse_ref[0] = m_scr[...] + jnp.log(s_scr[...])   # LSE over negatives

    return kernel


def hybrid_contrastive_loss(online_emb, mom_emb, queue, temp, *, tk=None,
                            stream_dtype=None, split_cores=True):
    """Forward of HybridContrastiveLoss.  stream_dtype=jnp.bfloat16 halves the
    dominant HBM traffic (queue stream) while keeping all accumulation f32."""
    if stream_dtype is not None:
        online_emb = online_emb.astype(stream_dtype)
        mom_emb = mom_emb.astype(stream_dtype)
        queue = queue.astype(stream_dtype)

    N, D = online_emb.shape
    D2, K = queue.shape
    assert D == D2, (D, D2)

    q_bytes = jnp.dtype(queue.dtype).itemsize
    e_bytes = jnp.dtype(online_emb.dtype).itemsize

    # --- Queue tile width along K (large tiles amortize per-step overhead). ---
    if tk is None:
        cap = 8192 if q_bytes <= 2 else 4096
        if K <= cap:
            tk = K
        else:
            tk = cap
            for cand in range(cap, 127, -128):   # prefer tk that divides K
                if K % cand == 0:
                    tk = cand
                    break
    else:
        tk = min(int(tk), K)
        if tk != K:
            tk = max(128, (tk // 128) * 128)

    nk = pl.cdiv(K, tk)
    num_cores = 2 if (split_cores and nk >= 2) else 1
    npc = pl.cdiv(nk, num_cores)

    # Lane sub-chunk: bounds the live [N, chunk] f32 working set regardless of
    # how large the DMA tile (tk) is.
    chunk = tk
    for cand in (512, 256, 128):
        if tk > cand and tk % cand == 0:
            chunk = cand
            break

    temp_arr = jnp.asarray(temp, dtype=jnp.float32).reshape(1, 1)

    vmem_needed = (2 * D * tk * q_bytes           # queue tile, double-buffered
                   + 2 * 2 * N * D * e_bytes      # online + mom
                   + 8 * max(8, N) * 128 * 4      # scratch / outputs (padded)
                   + (4 << 20))                   # headroom
    vmem_limit = int(min(48 << 20, max(32 << 20, 2 * vmem_needed)))

    grid_spec = pltpu.PrefetchScalarGridSpec(
        num_scalar_prefetch=0,
        grid=(num_cores, npc),
        in_specs=[
            pl.BlockSpec(memory_space=pltpu.MemorySpace.SMEM),     # temp (1,1)
            pl.BlockSpec((N, D), lambda c, k: (0, 0)),             # online (resident)
            pl.BlockSpec((N, D), lambda c, k: (0, 0)),             # mom (resident)
            # Queue tile streamed over K; clamped index so the (at most one)
            # overhang step of an odd split re-uses the resident block (no
            # extra DMA) and is fully masked in-kernel.
            pl.BlockSpec((D, tk),
                         lambda c, k: (0, jnp.minimum(c * npc + k, nk - 1))),
        ],
        out_specs=[
            pl.BlockSpec((1, N, 1), lambda c, k: (c, 0, 0)),       # per-core LSE
            pl.BlockSpec((1, N, 1), lambda c, k: (c, 0, 0)),       # per-core pos
        ],
        scratch_shapes=[
            pltpu.VMEM((N, 1), jnp.float32),                       # running max
            pltpu.VMEM((N, 1), jnp.float32),                       # running exp-sum
        ],
    )

    cost = pl.CostEstimate(
        flops=int(2 * N * D * K + 2 * N * D),
        transcendentals=int(N * (K + 2 * num_cores)),
        bytes_accessed=int(D * K * q_bytes + 2 * N * D * e_bytes
                           + 2 * num_cores * N * 4 + 4),
    )

    lse_parts, pos_parts = pl.pallas_call(
        _make_kernel(N, D, K, tk, chunk, npc, num_cores),
        grid_spec=grid_spec,
        out_shape=[
            jax.ShapeDtypeStruct((num_cores, N, 1), jnp.float32),
            jax.ShapeDtypeStruct((num_cores, N, 1), jnp.float32),
        ],
        compiler_params=pltpu.CompilerParams(
            dimension_semantics=("parallel", "arbitrary"),
            vmem_limit_bytes=vmem_limit),
        cost_estimate=cost,
    )(temp_arr, online_emb, mom_emb, queue)

    # Tiny XLA epilogue: combine per-core partial LSEs with the positive
    # (label-0) logit and reduce to the scalar loss.
    lse_c = lse_parts[:, :, 0]                 # (C, N) LSE over each core's negatives
    pos = pos_parts[0, :, 0]                   # (N,)   positive logit
    m = jnp.maximum(jnp.max(lse_c, axis=0), pos)
    total_lse = m + jnp.log(jnp.sum(jnp.exp(lse_c - m[None, :]), axis=0)
                            + jnp.exp(pos - m))
    ce = jnp.mean(total_lse - pos)
    # loss_online and loss_momentum are identical in the forward pass
    # (temp vs temp.detach() differ only in the backward pass).
    return LOSS_ALPHA * ce + (1.0 - LOSS_ALPHA) * ce


def reference_loss(online_emb, mom_emb, queue, temp):
    online = online_emb.astype(jnp.float32)
    mom = mom_emb.astype(jnp.float32)
    q = queue.astype(jnp.float32)
    pos = jnp.einsum('nd,nd->n', online, mom)
    neg = jnp.einsum('nd,dk->nk', online, q)
    logits = jnp.concatenate([pos[:, None], neg], axis=1) / temp
    lse = jax.scipy.special.logsumexp(logits, axis=1)
    ce = jnp.mean(lse - logits[:, 0])
    return LOSS_ALPHA * ce + (1.0 - LOSS_ALPHA) * ce


if __name__ == "__main__":
    key = jax.random.PRNGKey(0)
    k1, k2, k3 = jax.random.split(key, 3)

    # Small shapes: batch N=8, embedding dim D=128, queue K=320.
    # K=320 with tk=128 exercises multi-tile streaming, the 2-way core split
    # (odd tile count -> one clamped+masked overhang step) and the partial
    # last-tile masking path.
    N, D, K = 8, 128, 320
    online = jax.random.normal(k1, (N, D), dtype=jnp.float32)
    mom = jax.random.normal(k2, (N, D), dtype=jnp.float32)
    queue = jax.random.normal(k3, (D, K), dtype=jnp.float32)
    # L2-normalize, as typical for MoCo-style embeddings.
    online = online / jnp.linalg.norm(online, axis=-1, keepdims=True)
    mom = mom / jnp.linalg.norm(mom, axis=-1, keepdims=True)
    queue = queue / jnp.linalg.norm(queue, axis=0, keepdims=True)
    temp = jnp.float32(0.07)

    ref = reference_loss(online, mom, queue, temp)

    # 1) f32 path, small tk -> multi-tile + dual-core + masking paths.
    loss = hybrid_contrastive_loss(online, mom, queue, temp, tk=128)
    jax.block_until_ready(loss)
    assert jnp.allclose(loss, ref, rtol=1e-3, atol=1e-3), (loss, ref)

    # 2) bf16 streaming path (bandwidth-optimal configuration); compared
    #    against the reference evaluated on the same bf16-cast inputs.
    online_bf = online.astype(jnp.bfloat16)
    mom_bf = mom.astype(jnp.bfloat16)
    queue_bf = queue.astype(jnp.bfloat16)
    loss_bf = hybrid_contrastive_loss(online_bf, mom_bf, queue_bf, temp, tk=128)
    jax.block_until_ready(loss_bf)
    ref_bf = reference_loss(online_bf, mom_bf, queue_bf, temp)
    assert jnp.allclose(loss_bf, ref_bf, rtol=1e-2, atol=1e-2), (loss_bf, ref_bf)

    # 3) Default tile selection (single full-K tile at these sizes).
    loss_def = hybrid_contrastive_loss(online, mom, queue, temp)
    jax.block_until_ready(loss_def)
    assert jnp.allclose(loss_def, ref, rtol=1e-3, atol=1e-3), (loss_def, ref)

    print("KERNEL_OK")
</pallas_src>

<mosaic_0001>
module attributes {stable_mosaic.version = 11 : i64} {
  func.func @kernel(%arg0: i32, %arg1: i32, %arg2: memref<1x1xf32, #tpu.memory_space<smem>>, %arg3: memref<8x128xf32, #tpu.memory_space<vmem>>, %arg4: memref<8x128xf32, #tpu.memory_space<vmem>>, %arg5: memref<128x128xf32, #tpu.memory_space<vmem>>, %arg6: memref<1x8x1xf32, #tpu.memory_space<vmem>>, %arg7: memref<1x8x1xf32, #tpu.memory_space<vmem>>, %arg8: memref<8x1xf32, #tpu.memory_space<vmem>>, %arg9: memref<8x1xf32, #tpu.memory_space<vmem>>) attributes {dimension_semantics = [#tpu.dimension_semantics<parallel>, #tpu.dimension_semantics<arbitrary>], iteration_bounds = array<i64: 2, 2>, scalar_prefetch = 0 : i64, scratch_operands = 2 : i64, tpu.core_type = #tpu.core_type<tc>, window_params = [{transform_indices = @transform_0, window_bounds = array<i64: 1, 1>}, {pipeline_mode = #tpu.pipeline_mode<synchronous>, transform_indices = @transform_1, window_bounds = array<i64: 8, 128>}, {pipeline_mode = #tpu.pipeline_mode<synchronous>, transform_indices = @transform_2, window_bounds = array<i64: 8, 128>}, {transform_indices = @transform_3, window_bounds = array<i64: 128, 128>}, {transform_indices = @transform_4, window_bounds = array<i64: 1, 8, 1>}, {transform_indices = @transform_5, window_bounds = array<i64: 1, 8, 1>}]} {
    %c0 = arith.constant 0 : index
    %c0_0 = arith.constant 0 : index
    %0 = memref.load %arg2[%c0, %c0_0] : memref<1x1xf32, #tpu.memory_space<smem>>
    %cst = arith.constant 1.000000e+00 : f32
    %1 = arith.divf %cst, %0 : f32
    %c0_i32 = arith.constant 0 : i32
    %2 = arith.cmpi eq, %arg1, %c0_i32 : i32
    %3 = arith.extui %2 : i1 to i32
    %c0_i32_1 = arith.constant 0 : i32
    %4 = arith.cmpi ne, %3, %c0_i32_1 : i32
    scf.if %4 {
      %cst_21 = arith.constant 0xFF800000 : f32
      %44 = vector.broadcast %cst_21 : f32 to vector<8x1xf32>
      %c0_22 = arith.constant 0 : index
      %c0_23 = arith.constant 0 : index
      %45 = vector.load %arg8[%c0_22, %c0_23] : memref<8x1xf32, #tpu.memory_space<vmem>>, vector<8x1xf32>
      tpu.vector_store %arg8[%c0_22, %c0_23], %44 {strides = array<i32>} : memref<8x1xf32, #tpu.memory_space<vmem>>, vector<8x1xf32>,
      %cst_24 = arith.constant 0.000000e+00 : f32
      %46 = vector.broadcast %cst_24 : f32 to vector<8x1xf32>
      %c0_25 = arith.constant 0 : index
      %c0_26 = arith.constant 0 : index
      %47 = vector.load %arg9[%c0_25, %c0_26] : memref<8x1xf32, #tpu.memory_space<vmem>>, vector<8x1xf32>
      tpu.vector_store %arg9[%c0_25, %c0_26], %46 {strides = array<i32>} : memref<8x1xf32, #tpu.memory_space<vmem>>, vector<8x1xf32>,
    } else {
    }
    %c0_2 = arith.constant 0 : index
    %c0_3 = arith.constant 0 : index
    %5 = vector.load %arg3[%c0_2, %c0_3] : memref<8x128xf32, #tpu.memory_space<vmem>>, vector<8x128xf32>
    %c2_i32 = arith.constant 2 : i32
    %6 = arith.muli %arg0, %c2_i32 : i32
    %7 = arith.addi %6, %arg1 : i32
    %c128_i32 = arith.constant 128 : i32
    %8 = arith.muli %7, %c128_i32 : i32
    %c0_4 = arith.constant 0 : index
    %c0_5 = arith.constant 0 : index
    %9 = vector.load %arg8[%c0_4, %c0_5] : memref<8x1xf32, #tpu.memory_space<vmem>>, vector<8x1xf32>
    %c0_6 = arith.constant 0 : index
    %c0_7 = arith.constant 0 : index
    %10 = vector.load %arg9[%c0_6, %c0_7] : memref<8x1xf32, #tpu.memory_space<vmem>>, vector<8x1xf32>
    %c0_i32_8 = arith.constant 0 : i32
    %c128_i32_9 = arith.constant 128 : i32
    %11 = arith.muli %c0_i32_8, %c128_i32_9 : i32
    %12 = tpu.assume_multiple %11, 128 : i32
    %c0_10 = arith.constant 0 : index
    %13 = arith.index_cast %12 : i32 to index
    %14 = vector.load %arg5[%c0_10, %13] : memref<128x128xf32, #tpu.memory_space<vmem>>, vector<128x128xf32>
    %cst_11 = arith.constant dense<0.000000e+00> : vector<8x128xf32>
    %15 = tpu.matmul %5, %14, %cst_11 {dimension_numbers = #tpu.dot_dimension_numbers<[1], [0], [0], [1], [0, 0, 1, 1], [], []>} : vector<8x128xf32>, vector<128x128xf32>, vector<8x128xf32> -> vector<8x128xf32>
    %16 = vector.broadcast %1 : f32 to vector<8x128xf32>
    %17 = arith.mulf %15, %16 : vector<8x128xf32>
    %18 = tpu.iota {dimensions = array<i32: 1>} : vector<8x128xi32>
    %19 = vector.broadcast %8 : i32 to vector<8x128xi32>
    %20 = arith.addi %18, %19 : vector<8x128xi32>
    %21 = vector.broadcast %12 : i32 to vector<8x128xi32>
    %22 = arith.addi %20, %21 : vector<8x128xi32>
    %c320_i32 = arith.constant 320 : i32
    %23 = vector.broadcast %c320_i32 : i32 to vector<8x128xi32>
    %24 = arith.cmpi slt, %22, %23 : vector<8x128xi32>
    %cst_12 = arith.constant 0xFF800000 : f32
    %25 = vector.broadcast %cst_12 : f32 to vector<8x128xf32>
    %26 = arith.select %24, %17, %25 : vector<8x128xi1>, vector<8x128xf32>
    %cst_13 = arith.constant dense<0xFF800000> : vector<8xf32>
    %27 = vector.multi_reduction <maximumf>, %26, %cst_13 [1] : vector<8x128xf32> to vector<8xf32>
    %28 = vector.shape_cast %27 : vector<8xf32> to vector<8x1xf32>
    %29 = arith.maximumf %9, %28 : vector<8x1xf32>
    %30 = arith.subf %9, %29 : vector<8x1xf32>
    %31 = math.exp %30 : vector<8x1xf32>
    %32 = arith.mulf %10, %31 : vector<8x1xf32>
    %33 = vector.broadcast %29 : vector<8x1xf32> to vector<8x128xf32>
    %34 = arith.subf %26, %33 : vector<8x128xf32>
    %35 = math.exp %34 : vector<8x128xf32>
    %cst_14 = arith.constant dense<0.000000e+00> : vector<8xf32>
    %36 = vector.multi_reduction <add>, %35, %cst_14 [1] : vector<8x128xf32> to vector<8xf32>
    %37 = vector.shape_cast %36 : vector<8xf32> to vector<8x1xf32>
    %38 = arith.addf %32, %37 : vector<8x1xf32>
    %c1_i32 = arith.constant 1 : i32
    %c0_15 = arith.constant 0 : index
    %c0_16 = arith.constant 0 : index
    %39 = vector.load %arg8[%c0_15, %c0_16] : memref<8x1xf32, #tpu.memory_space<vmem>>, vector<8x1xf32>
    tpu.vector_store %arg8[%c0_15, %c0_16], %29 {strides = array<i32>} : memref<8x1xf32, #tpu.memory_space<vmem>>, vector<8x1xf32>,
    %c0_17 = arith.constant 0 : index
    %c0_18 = arith.constant 0 : index
    %40 = vector.load %arg9[%c0_17, %c0_18] : memref<8x1xf32, #tpu.memory_space<vmem>>, vector<8x1xf32>
    tpu.vector_store %arg9[%c0_17, %c0_18], %38 {strides = array<i32>} : memref<8x1xf32, #tpu.memory_space<vmem>>, vector<8x1xf32>,
    %c1_i32_19 = arith.constant 1 : i32
    %41 = arith.cmpi eq, %arg1, %c1_i32_19 : i32
    %42 = arith.extui %41 : i1 to i32
    %c0_i32_20 = arith.constant 0 : i32
    %43 = arith.cmpi ne, %42, %c0_i32_20 : i32
    scf.if %43 {
      %c0_21 = arith.constant 0 : index
      %c0_22 = arith.constant 0 : index
      %44 = vector.load %arg4[%c0_21, %c0_22] : memref<8x128xf32, #tpu.memory_space<vmem>>, vector<8x128xf32>
      %45 = arith.mulf %5, %44 : vector<8x128xf32>
      %cst_23 = arith.constant dense<0.000000e+00> : vector<8xf32>
      %46 = vector.multi_reduction <add>, %45, %cst_23 [1] : vector<8x128xf32> to vector<8xf32>
      %47 = vector.shape_cast %46 : vector<8xf32> to vector<8x1xf32>
      %48 = vector.broadcast %1 : f32 to vector<8x1xf32>
      %49 = arith.mulf %47, %48 : vector<8x1xf32>
      %c0_24 = arith.constant 0 : index
      %c0_25 = arith.constant 0 : index
      %c0_26 = arith.constant 0 : index
      %50 = vector.load %arg7[%c0_24, %c0_25, %c0_26] : memref<1x8x1xf32, #tpu.memory_space<vmem>>, vector<1x8x1xf32>
      %51 = vector.shape_cast %50 : vector<1x8x1xf32> to vector<8x1xf32>
      %52 = vector.shape_cast %49 : vector<8x1xf32> to vector<1x8x1xf32>
      tpu.vector_store %arg7[%c0_24, %c0_25, %c0_26], %52 {strides = array<i32>} : memref<1x8x1xf32, #tpu.memory_space<vmem>>, vector<1x8x1xf32>,
      %c0_27 = arith.constant 0 : index
      %c0_28 = arith.constant 0 : index
      %53 = vector.load %arg8[%c0_27, %c0_28] : memref<8x1xf32, #tpu.memory_space<vmem>>, vector<8x1xf32>
      %c0_29 = arith.constant 0 : index
      %c0_30 = arith.constant 0 : index
      %54 = vector.load %arg9[%c0_29, %c0_30] : memref<8x1xf32, #tpu.memory_space<vmem>>, vector<8x1xf32>
      %55 = math.log %54 : vector<8x1xf32>
      %56 = arith.addf %53, %55 : vector<8x1xf32>
      %c0_31 = arith.constant 0 : index
      %c0_32 = arith.constant 0 : index
      %c0_33 = arith.constant 0 : index
      %57 = vector.load %arg6[%c0_31, %c0_32, %c0_33] : memref<1x8x1xf32, #tpu.memory_space<vmem>>, vector<1x8x1xf32>
      %58 = vector.shape_cast %57 : vector<1x8x1xf32> to vector<8x1xf32>
      %59 = vector.shape_cast %56 : vector<8x1xf32> to vector<1x8x1xf32>
      tpu.vector_store %arg6[%c0_31, %c0_32, %c0_33], %59 {strides = array<i32>} : memref<1x8x1xf32, #tpu.memory_space<vmem>>, vector<1x8x1xf32>,
    } else {
    }
    return
  }
  func.func @transform_0(%arg0: i32, %arg1: i32) -> (i32, i32) {
    %c0_i32 = arith.constant 0 : i32
    %c0_i32_0 = arith.constant 0 : i32
    %c0_i32_1 = arith.constant 0 : i32
    return %c0_i32, %c0_i32_0 : i32, i32
  }
  func.func @transform_1(%arg0: i32, %arg1: i32) -> (i32, i32) {
    %c0_i32 = arith.constant 0 : i32
    %c0_i32_0 = arith.constant 0 : i32
    %c0_i32_1 = arith.constant 0 : i32
    return %c0_i32, %c0_i32_0 : i32, i32
  }
  func.func @transform_2(%arg0: i32, %arg1: i32) -> (i32, i32) {
    %c0_i32 = arith.constant 0 : i32
    %c0_i32_0 = arith.constant 0 : i32
    %c0_i32_1 = arith.constant 0 : i32
    return %c0_i32, %c0_i32_0 : i32, i32
  }
  func.func @transform_3(%arg0: i32, %arg1: i32) -> (i32, i32) {
    %c2_i32 = arith.constant 2 : i32
    %0 = arith.muli %arg0, %c2_i32 : i32
    %1 = arith.addi %0, %arg1 : i32
    %c2_i32_0 = arith.constant 2 : i32
    %2 = arith.minsi %1, %c2_i32_0 : i32
    %c0_i32 = arith.constant 0 : i32
    %c0_i32_1 = arith.constant 0 : i32
    return %c0_i32, %2 : i32, i32
  }
  func.func @transform_4(%arg0: i32, %arg1: i32) -> (i32, i32, i32) {
    %c0_i32 = arith.constant 0 : i32
    %c0_i32_0 = arith.constant 0 : i32
    %c0_i32_1 = arith.constant 0 : i32
    return %arg0, %c0_i32, %c0_i32_0 : i32, i32, i32
  }
  func.func @transform_5(%arg0: i32, %arg1: i32) -> (i32, i32, i32) {
    %c0_i32 = arith.constant 0 : i32
    %c0_i32_0 = arith.constant 0 : i32
    %c0_i32_1 = arith.constant 0 : i32
    return %arg0, %c0_i32, %c0_i32_0 : i32, i32, i32
  }
}

</mosaic_0001>

<llo_original>
// kernel: tpu_custom_call.1
$region0: #{tpu_custom_call.1}
  #allocation0 [shape = 'u32[]', space=smem, size = 0x4, offset = 0x4, fixed_abs, tag = 'smem constant byte address 0x4 - core index']
  #allocation1 [shape = 'u32[144,128]{1,0:T(1,128)}', space=vmem, size = 0x12000, scoped, tag = 'internal scratch']
  #allocation2 [shape = 'f32[8,1]{1,0:T(8,128)}', space=vmem, size = 0x1000, scoped, tag = 'scratch operand']
  #allocation3 [shape = 'f32[8,1]{1,0:T(8,128)}', space=vmem, size = 0x1000, scoped, tag = 'scratch operand']
  #allocation4 [shape = 'f32[1,1]{1,0:T(1,128)S(6)}', space=smem, size = 0x200, scoped, tag = 'scoped memory for tpu_custom_call.1']
  %s0 = inlined_call_operand.<no memory space> [shape: f32[1,1], index: 0, kind: input, shape index: {}]
  %s1 = inlined_call_operand.vmem [shape: f32[8,128], index: 1, kind: input, shape index: {}]
  %s2 = inlined_call_operand.vmem [shape: f32[8,128], index: 2, kind: input, shape index: {}]
  %s3 = inlined_call_operand.vmem [shape: f32[128,320], index: 3, kind: input, shape index: {}]
  %s4 = inlined_call_operand.vmem [shape: f32[2,8,1], index: 4, kind: output, shape index: {0}]
  %s5 = inlined_call_operand.vmem [shape: f32[2,8,1], index: 5, kind: output, shape index: {1}]
  %6 = xla_tuple %s4, %s5
  %s7 = sld [smem:[#allocation0]]
  $region103: #{tpu_custom_call.1} parent=0
    _
  %s9 = ssub.s32 1, %s7
  %s10 = scalar_select 0, %s9, %s7
  %11 = sst [smem:[#allocation4]] %s0
  $region1: #{tpu_custom_call.1} parent=0
    #allocation5 [shape = 'u8[131072]{0}', space=vmem, size = 0x20000, scoped, tag = 'input window, operand 3']
    loop: start=0, step=1, limit=6
    $region2: #{tpu_custom_call.1} parent=1 // loop_pre_header
      _
    $region3: #{tpu_custom_call.1} parent=1 // loop_header
      %s13 = sphi 0, %s17
      %p14 = scmp.ge.s32.totalorder %s13, 6
      %s20 = sphi 0, %s32
      %s21 = sphi 0, %s28
      %s22 = sphi 0, %s20
      %s23 = sphi 0, %s21
      %s24 = sphi 0, %s22
      %s25 = sphi 0, %s23
      %s33 = sphi 0, %s33
      %s35 = sphi 0, %s33
      %s36 = sphi 0, %s35
      %s50 = sphi 0, %s36
      %s54 = sphi 0, %s54
      %s56 = sphi 0, %s54
      %s57 = sphi 0, %s56
      %s71 = sphi 0, %s57
      %s75 = sphi 0, %s75
      %s77 = sphi 0, %s75
      %s78 = sphi 0, %s77
      %s92 = sphi 0, %s78
      %s106 = sphi 0, %s108
      %s109 = sphi 0, %s106
      %s110 = sphi 0, %s109
      %s126 = sphi 0, %s110
      %s132 = sphi 0, %s134
      %s135 = sphi 0, %s132
      %s136 = sphi 0, %s135
      %s152 = sphi 0, %s136
      %s158 = sphi 0, %s160
      %s161 = sphi 0, %s158
      %s162 = sphi 0, %s161
      %s178 = sphi 0, %s162
    $region4: #{tpu_custom_call.1} parent=1 // loop_header_branch
      %16 = sbr.rel (%p14) target = $region8
    $region5: #{tpu_custom_call.1} parent=1 // loop_body
      %s18 = ssub.s32 %s13, 1
      %s19 = ssub.s32 %s13, 2
      %s26 = sadd.s32 1, %s21
      %p27 = scmp.ge.s32.totalorder %s26, 2
      %s28 = scalar_select %p27, 0, %s26
      %s29 = sadd.s32 1, %s20
      %s30 = scalar_select %p27, %s29, %s20
      %p31 = scmp.ge.s32.totalorder %s30, 2
      %s32 = scalar_select %p31, 0, %s30
      %s34 = sadd.s32 %s33, 1
      %p37 = scmp.eq.s32.totalorder %s13, 3
      %p38 = scmp.ne.s32.totalorder %s33, %s35
      %p39 = scmp.eq.s32.totalorder %s13, 0
      %p40 = por %p38, %p39
      %p41 = scmp.ne.s32.totalorder %s33, %s35
      %p42 = scmp.eq.s32.totalorder %s18, 3
      %p43 = por %p41, %p42
      %p44 = scmp.ne.s32.totalorder %s35, %s36
      %p45 = scmp.eq.s32.totalorder %s18, 0
      %p46 = por %p44, %p45
      %p47 = scmp.ne.s32.totalorder %s35, %s36
      %p48 = scmp.eq.s32.totalorder %s19, 3
      %p49 = por %p47, %p48
      %p51 = scmp.ne.s32.totalorder %s36, %s50
      %p52 = scmp.eq.s32.totalorder %s19, 0
      %p53 = por %p51, %p52
      %s55 = sadd.s32 %s54, 1
      %p58 = scmp.eq.s32.totalorder %s13, 3
      %p59 = scmp.ne.s32.totalorder %s54, %s56
      %p60 = scmp.eq.s32.totalorder %s13, 0
      %p61 = por %p59, %p60
      %p62 = scmp.ne.s32.totalorder %s54, %s56
      %p63 = scmp.eq.s32.totalorder %s18, 3
      %p64 = por %p62, %p63
      %p65 = scmp.ne.s32.totalorder %s56, %s57
      %p66 = scmp.eq.s32.totalorder %s18, 0
      %p67 = por %p65, %p66
      %p68 = scmp.ne.s32.totalorder %s56, %s57
      %p69 = scmp.eq.s32.totalorder %s19, 3
      %p70 = por %p68, %p69
      %p72 = scmp.ne.s32.totalorder %s57, %s71
      %p73 = scmp.eq.s32.totalorder %s19, 0
      %p74 = por %p72, %p73
      %s76 = sadd.s32 %s75, 1
      %p79 = scmp.eq.s32.totalorder %s13, 3
      %p80 = scmp.ne.s32.totalorder %s75, %s77
      %p81 = scmp.eq.s32.totalorder %s13, 0
      %p82 = por %p80, %p81
      %p83 = scmp.ne.s32.totalorder %s75, %s77
      %p84 = scmp.eq.s32.totalorder %s18, 3
      %p85 = por %p83, %p84
      %p86 = scmp.ne.s32.totalorder %s77, %s78
      %p87 = scmp.eq.s32.totalorder %s18, 0
      %p88 = por %p86, %p87
      %p89 = scmp.ne.s32.totalorder %s77, %s78
      %p90 = scmp.eq.s32.totalorder %s19, 3
      %p91 = por %p89, %p90
      %p93 = scmp.ne.s32.totalorder %s78, %s92
      %p94 = scmp.eq.s32.totalorder %s19, 0
      %p95 = por %p93, %p94
      %s96 = smul.u32 %s20, 2
      %s97 = sadd.s32 %s96, %s21
      %p98 = scmp.lt.s32.totalorder %s97, 2
      %s99 = scalar_select %p98, %s97, 2
      %s100 = smul.u32 %s32, 2
      %s101 = sadd.s32 %s100, %s28
      %p102 = scmp.lt.s32.totalorder %s101, 2
      %s103 = scalar_select %p102, %s101, 2
      %s104 = ssub.s32 %s99, %s103
      %p105 = scmp.eq.s32.totalorder %s104, 0
      %s107 = sadd.s32 %s106, 1
      %s108 = scalar_select %p105, %s106, %s107
      %p111 = pneg %p105
      %p112 = scmp.eq.s32.totalorder %s13, 3
      %p113 = por %p111, %p112
      %p114 = scmp.ne.s32.totalorder %s106, %s109
      %p115 = scmp.eq.s32.totalorder %s13, 0
      %p116 = por %p114, %p115
      %p117 = scmp.ne.s32.totalorder %s106, %s109
      %p118 = scmp.eq.s32.totalorder %s18, 3
      %p119 = por %p117, %p118
      %p120 = scmp.ne.s32.totalorder %s109, %s110
      %p121 = scmp.eq.s32.totalorder %s18, 0
      %p122 = por %p120, %p121
      %p123 = scmp.ne.s32.totalorder %s109, %s110
      %p124 = scmp.eq.s32.totalorder %s19, 3
      %p125 = por %p123, %p124
      %p127 = scmp.ne.s32.totalorder %s110, %s126
      %p128 = scmp.eq.s32.totalorder %s19, 0
      %p129 = por %p127, %p128
      %s130 = ssub.s32 %s20, %s32
      %p131 = scmp.eq.s32.totalorder %s130, 0
      %s133 = sadd.s32 %s132, 1
      %s134 = scalar_select %p131, %s132, %s133
      %p137 = pneg %p131
      %p138 = scmp.eq.s32.totalorder %s13, 3
      %p139 = por %p137, %p138
      %p140 = scmp.ne.s32.totalorder %s132, %s135
      %p141 = scmp.eq.s32.totalorder %s13, 0
      %p142 = por %p140, %p141
      %p143 = scmp.ne.s32.totalorder %s132, %s135
      %p144 = scmp.eq.s32.totalorder %s18, 3
      %p145 = por %p143, %p144
      %p146 = scmp.ne.s32.totalorder %s135, %s136
      %p147 = scmp.eq.s32.totalorder %s18, 0
      %p148 = por %p146, %p147
      %p149 = scmp.ne.s32.totalorder %s135, %s136
      %p150 = scmp.eq.s32.totalorder %s19, 3
      %p151 = por %p149, %p150
      %p153 = scmp.ne.s32.totalorder %s136, %s152
      %p154 = scmp.eq.s32.totalorder %s19, 0
      %p155 = por %p153, %p154
      %s156 = ssub.s32 %s20, %s32
      %p157 = scmp.eq.s32.totalorder %s156, 0
      %s159 = sadd.s32 %s158, 1
      %s160 = scalar_select %p157, %s158, %s159
      %p163 = pneg %p157
      %p164 = scmp.eq.s32.totalorder %s13, 3
      %p165 = por %p163, %p164
      %p166 = scmp.ne.s32.totalorder %s158, %s161
      %p167 = scmp.eq.s32.totalorder %s13, 0
      %p168 = por %p166, %p167
      %p169 = scmp.ne.s32.totalorder %s158, %s161
      %p170 = scmp.eq.s32.totalorder %s18, 3
      %p171 = por %p169, %p170
      %p172 = scmp.ne.s32.totalorder %s161, %s162
      %p173 = scmp.eq.s32.totalorder %s18, 0
      %p174 = por %p172, %p173
      %p175 = scmp.ne.s32.totalorder %s161, %s162
      %p176 = scmp.eq.s32.totalorder %s19, 3
      %p177 = por %p175, %p176
      %p179 = scmp.ne.s32.totalorder %s162, %s178
      %p180 = scmp.eq.s32.totalorder %s19, 0
      %p181 = por %p179, %p180
      %p182 = scmp.le.s32.totalorder 1, %s13
      %p183 = scmp.lt.s32.totalorder %s13, 5
      %p184 = pnand %p182, %p183
      %p185 = pneg %p184
      // Predicated region
      $region9: #{tpu_custom_call.1} parent=5 // pred_check
        _
      $region10: #{tpu_custom_call.1} parent=5 // pred_check_branch
        %187 = sbr.rel (%p184) target = $region12
      $region11: #{tpu_custom_call.1} parent=5 // pred_region
        %s188 = ssub.s32 %s13, 1
        // Predicated region
        $region13: #{tpu_custom_call.1} parent=11 // pred_check
          %p189 = pneg %p46
        $region14: #{tpu_custom_call.1} parent=11 // pred_check_branch
          %191 = sbr.rel (%p189) target = $region16
        $region15: #{tpu_custom_call.1} parent=11 // pred_region
          _
        $region16: #{tpu_custom_call.1} parent=11 // pred_fallthru
          _
        // Predicated region
        $region17: #{tpu_custom_call.1} parent=11 // pred_check
          %p192 = pneg %p67
        $region18: #{tpu_custom_call.1} parent=11 // pred_check_branch
          %194 = sbr.rel (%p192) target = $region20
        $region19: #{tpu_custom_call.1} parent=11 // pred_region
          _
        $region20: #{tpu_custom_call.1} parent=11 // pred_fallthru
          _
        // Predicated region
        $region21: #{tpu_custom_call.1} parent=11 // pred_check
          %p195 = pneg %p88
        $region22: #{tpu_custom_call.1} parent=11 // pred_check_branch
          %197 = sbr.rel (%p195) target = $region24
        $region23: #{tpu_custom_call.1} parent=11 // pred_region
          _
        $region24: #{tpu_custom_call.1} parent=11 // pred_fallthru
          _
      $region12: #{tpu_custom_call.1} parent=5 // pred_fallthru
        _
      %p198 = scmp.lt.s32.totalorder %s13, 4
      // Predicated region
      $region25: #{tpu_custom_call.1} parent=5 // pred_check
        %p199 = pneg %p198
      $region26: #{tpu_custom_call.1} parent=5 // pred_check_branch
        %201 = sbr.rel (%p199) target = $region28
      $region27: #{tpu_custom_call.1} parent=5 // pred_region
        // Predicated region
        $region29: #{tpu_custom_call.1} parent=27 // pred_check
          %p202 = pneg %p116
        $region30: #{tpu_custom_call.1} parent=27 // pred_check_branch
          %204 = sbr.rel (%p202) target = $region32
        $region31: #{tpu_custom_call.1} parent=27 // pred_region
          %s205 = sand.u32 %s106, 1
          %s206 = sand.u32 %s106, 1
          %s207 = smul.addr %s206, 128
          %s208 = scalar_lea.vmem [#allocation5], %s207
          %s209 = smul.u32 %s20, 2
          %s210 = sadd.s32 %s209, %s21
          %p211 = scmp.lt.s32.totalorder %s210, 2
          %s212 = scalar_select %p211, %s210, 2
          %s213 = smul.addr %s212, 8
          %s214 = scalar_lea.vmem %s3, %s213
          // Predicated region
          $region33: #{tpu_custom_call.1} parent=31 // pred_check
            _
          $region34: #{tpu_custom_call.1} parent=31 // pred_check_branch
            %216 = sbr.rel (0) target = $region36
          $region35: #{tpu_custom_call.1} parent=31 // pred_region
            // Predicated region
            $region37: #{tpu_custom_call.1} parent=35 // pred_check
              _
            $region38: #{tpu_custom_call.1} parent=35 // pred_check_branch
              %218 = sbr.rel (0) target = $region40
            $region39: #{tpu_custom_call.1} parent=35 // pred_region
              // Predicated region
              $region52: #{tpu_custom_call.1} parent=39 // pred_check
                _
              $region53: #{tpu_custom_call.1} parent=39 // pred_check_branch
                %263 = sbr.rel (0) target = $region55
              $region54: #{tpu_custom_call.1} parent=39 // pred_region
                loop: start=0, step=1, limit=1
                $region56: #{tpu_custom_call.1} parent=54 // loop_pre_header
                  _
                $region57: #{tpu_custom_call.1} parent=54 // loop_header
                  %s265 = sphi 0, %s269
                  %p266 = scmp.ge.s32.totalorder %s265, 1
                  %s270 = sphi %s214, %s214
                  %s271 = sphi %s208, %s208
                $region58: #{tpu_custom_call.1} parent=54 // loop_header_branch
                  %268 = sbr.rel (%p266) target = $region62
                $region59: #{tpu_custom_call.1} parent=54 // loop_body
                  %v272 = vld [vmem:[%s270] sm:$0xff]
                  %273 = vst [vmem:[%s271] sm:$0xff] %v272
                  %v274 = vld [vmem:[%s270 + $0x18] sm:$0xff]
                  %275 = vst [vmem:[%s271 + $0x8] sm:$0xff] %v274
                  %v276 = vld [vmem:[%s270 + $0x30] sm:$0xff]
                  %277 = vst [vmem:[%s271 + $0x10] sm:$0xff] %v276
                  %v278 = vld [vmem:[%s270 + $0x48] sm:$0xff]
                  %279 = vst [vmem:[%s271 + $0x18] sm:$0xff] %v278
                  %v280 = vld [vmem:[%s270 + $0x60] sm:$0xff]
                  %281 = vst [vmem:[%s271 + $0x20] sm:$0xff] %v280
                  %v282 = vld [vmem:[%s270 + $0x78] sm:$0xff]
                  %283 = vst [vmem:[%s271 + $0x28] sm:$0xff] %v282
                  %v284 = vld [vmem:[%s270 + $0x90] sm:$0xff]
                  %285 = vst [vmem:[%s271 + $0x30] sm:$0xff] %v284
                  %v286 = vld [vmem:[%s270 + $0xa8] sm:$0xff]
                  %287 = vst [vmem:[%s271 + $0x38] sm:$0xff] %v286
                  %v288 = vld [vmem:[%s270 + $0xc0] sm:$0xff]
                  %289 = vst [vmem:[%s271 + $0x40] sm:$0xff] %v288
                  %v290 = vld [vmem:[%s270 + $0xd8] sm:$0xff]
                  %291 = vst [vmem:[%s271 + $0x48] sm:$0xff] %v290
                  %v292 = vld [vmem:[%s270 + $0xf0] sm:$0xff]
                  %293 = vst [vmem:[%s271 + $0x50] sm:$0xff] %v292
                  %v294 = vld [vmem:[%s270 + $0x108] sm:$0xff]
                  %295 = vst [vmem:[%s271 + $0x58] sm:$0xff] %v294
                  %v296 = vld [vmem:[%s270 + $0x120] sm:$0xff]
                  %297 = vst [vmem:[%s271 + $0x60] sm:$0xff] %v296
                  %v298 = vld [vmem:[%s270 + $0x138] sm:$0xff]
                  %299 = vst [vmem:[%s271 + $0x68] sm:$0xff] %v298
                  %v300 = vld [vmem:[%s270 + $0x150] sm:$0xff]
                  %301 = vst [vmem:[%s271 + $0x70] sm:$0xff] %v300
                  %v302 = vld [vmem:[%s270 + $0x168] sm:$0xff]
                  %303 = vst [vmem:[%s271 + $0x78] sm:$0xff] %v302
                $region60: #{tpu_custom_call.1} parent=54 // loop_footer
                  %s269 = sadd.s32 1, %s265
                $region61: #{tpu_custom_call.1} parent=54 // loop_footer_branch
                  %264 = sbr.rel target = $region57
                $region62: #{tpu_custom_call.1} parent=54 // loop_exit
                  _
              $region55: #{tpu_custom_call.1} parent=39 // pred_fallthru
                _
              // Predicated region
              $region63: #{tpu_custom_call.1} parent=39 // pred_check
                _
              $region64: #{tpu_custom_call.1} parent=39 // pred_check_branch
                %305 = sbr.rel target = $region66
              $region65: #{tpu_custom_call.1} parent=39 // pred_region
                _
              $region66: #{tpu_custom_call.1} parent=39 // pred_fallthru
                _
            $region40: #{tpu_custom_call.1} parent=35 // pred_fallthru
              _
            // Predicated region
            $region41: #{tpu_custom_call.1} parent=35 // pred_check
              _
            $region42: #{tpu_custom_call.1} parent=35 // pred_check_branch
              %220 = sbr.rel target = $region44
            $region43: #{tpu_custom_call.1} parent=35 // pred_region
              loop: start=0, step=1, limit=1
              $region45: #{tpu_custom_call.1} parent=43 // loop_pre_header
                _
              $region46: #{tpu_custom_call.1} parent=43 // loop_header
                %s223 = sphi 0, %s227
                %p224 = scmp.ge.s32.totalorder %s223, 1
                %s228 = sphi %s214, %s214
                %s229 = sphi %s208, %s208
              $region47: #{tpu_custom_call.1} parent=43 // loop_header_branch
                %226 = sbr.rel (%p224) target = $region51
              $region48: #{tpu_custom_call.1} parent=43 // loop_body
                %v230 = vld [vmem:[%s228] sm:$0xff]
                %231 = vst [vmem:[%s229] sm:$0xff] %v230
                %v232 = vld [vmem:[%s228 + $0x18] sm:$0xff]
                %233 = vst [vmem:[%s229 + $0x8] sm:$0xff] %v232
                %v234 = vld [vmem:[%s228 + $0x30] sm:$0xff]
                %235 = vst [vmem:[%s229 + $0x10] sm:$0xff] %v234
                %v236 = vld [vmem:[%s228 + $0x48] sm:$0xff]
                %237 = vst [vmem:[%s229 + $0x18] sm:$0xff] %v236
                %v238 = vld [vmem:[%s228 + $0x60] sm:$0xff]
                %239 = vst [vmem:[%s229 + $0x20] sm:$0xff] %v238
                %v240 = vld [vmem:[%s228 + $0x78] sm:$0xff]
                %241 = vst [vmem:[%s229 + $0x28] sm:$0xff] %v240
                %v242 = vld [vmem:[%s228 + $0x90] sm:$0xff]
                %243 = vst [vmem:[%s229 + $0x30] sm:$0xff] %v242
                %v244 = vld [vmem:[%s228 + $0xa8] sm:$0xff]
                %245 = vst [vmem:[%s229 + $0x38] sm:$0xff] %v244
                %v246 = vld [vmem:[%s228 + $0xc0] sm:$0xff]
                %247 = vst [vmem:[%s229 + $0x40] sm:$0xff] %v246
                %v248 = vld [vmem:[%s228 + $0xd8] sm:$0xff]
                %249 = vst [vmem:[%s229 + $0x48] sm:$0xff] %v248
                %v250 = vld [vmem:[%s228 + $0xf0] sm:$0xff]
                %251 = vst [vmem:[%s229 + $0x50] sm:$0xff] %v250
                %v252 = vld [vmem:[%s228 + $0x108] sm:$0xff]
                %253 = vst [vmem:[%s229 + $0x58] sm:$0xff] %v252
                %v254 = vld [vmem:[%s228 + $0x120] sm:$0xff]
                %255 = vst [vmem:[%s229 + $0x60] sm:$0xff] %v254
                %v256 = vld [vmem:[%s228 + $0x138] sm:$0xff]
                %257 = vst [vmem:[%s229 + $0x68] sm:$0xff] %v256
                %v258 = vld [vmem:[%s228 + $0x150] sm:$0xff]
                %259 = vst [vmem:[%s229 + $0x70] sm:$0xff] %v258
                %v260 = vld [vmem:[%s228 + $0x168] sm:$0xff]
                %261 = vst [vmem:[%s229 + $0x78] sm:$0xff] %v260
              $region49: #{tpu_custom_call.1} parent=43 // loop_footer
                %s227 = sadd.s32 1, %s223
              $region50: #{tpu_custom_call.1} parent=43 // loop_footer_branch
                %222 = sbr.rel target = $region46
              $region51: #{tpu_custom_call.1} parent=43 // loop_exit
                _
            $region44: #{tpu_custom_call.1} parent=35 // pred_fallthru
              _
          $region36: #{tpu_custom_call.1} parent=31 // pred_fallthru
            _
          %306 = vnop
        $region32: #{tpu_custom_call.1} parent=27 // pred_fallthru
          _
      $region28: #{tpu_custom_call.1} parent=5 // pred_fallthru
        _
      %p307 = scmp.le.s32.totalorder 1, %s13
      %p308 = scmp.lt.s32.totalorder %s13, 5
      %p309 = pnand %p307, %p308
      %p310 = pneg %p309
      // Predicated region
      $region67: #{tpu_custom_call.1} parent=5 // pred_check
        _
      $region68: #{tpu_custom_call.1} parent=5 // pred_check_branch
        %312 = sbr.rel (%p309) target = $region70
      $region69: #{tpu_custom_call.1} parent=5 // pred_region
        %s313 = ssub.s32 %s13, 1
        %s314 = sand.u32 %s109, 1
        %s315 = sand.u32 %s109, 1
        %s316 = smul.addr %s315, 128
        %s317 = scalar_lea.vmem [#allocation5], %s316
        // Predicated region
        $region71: #{tpu_custom_call.1} parent=69 // pred_check
          %p318 = pneg %p122
        $region72: #{tpu_custom_call.1} parent=69 // pred_check_branch
          %320 = sbr.rel (%p318) target = $region74
        $region73: #{tpu_custom_call.1} parent=69 // pred_region
          _
        $region74: #{tpu_custom_call.1} parent=69 // pred_fallthru
          _
        %p321 = pneg %p46
        %p322 = pneg %p43
        %p323 = pneg %p67
        %p324 = pneg %p64
        %p325 = pneg %p88
        %p326 = pneg %p85
        %s327 = sand.u32 %s109, 1
        %s328 = sand.u32 %s109, 1
        %s329 = smul.addr %s328, 128
        %s330 = scalar_lea.vmem [#allocation5], %s329
        %p331 = pneg %p122
        %p332 = pneg %p119
        %p333 = pneg %p148
        %p334 = pneg %p145
        %p335 = scmp.lt.s32.totalorder %s22, 1
        %s336 = scalar_select %p335, %s22, 1
        %s337 = smul.addr %s336, 8
        %s338 = scalar_lea.vmem %s4, %s337
        %p339 = pneg %p174
        %p340 = pneg %p171
        %p341 = scmp.lt.s32.totalorder %s22, 1
        %s342 = scalar_select %p341, %s22, 1
        %s343 = smul.addr %s342, 8
        %s344 = scalar_lea.vmem %s5, %s343
        %s345 = smul.u32 %s22, 2
        %s346 = sadd.s32 %s345, %s23
        %p347 = scmp.lt.s32.totalorder %s346, 2
        %s348 = scalar_select %p347, %s346, 2
        %p349 = scmp.lt.s32.totalorder %s22, 1
        %s350 = scalar_select %p349, %s22, 1
        %s351 = smul.addr %s350, 8
        %s352 = scalar_lea.vmem %s4, %s351
        %p353 = scmp.lt.s32.totalorder %s22, 1
        %s354 = scalar_select %p353, %s22, 1
        %s355 = smul.addr %s354, 8
        %s356 = scalar_lea.vmem %s5, %s355
        %s357 = sld [smem:[#allocation4]]
        %v358 = vstv %s357
        %v359 = vrcp.pop %v358
        %s360 = vtos %v359
        %p361 = scmp.eq.s32.totalorder %s23, 0
        // Predicated region
        $region75: #{tpu_custom_call.1} parent=69 // pred_check
          %p362 = pneg %p361
        $region76: #{tpu_custom_call.1} parent=69 // pred_check_branch
          %364 = sbr.rel (%p362) target = $region78
        $region77: #{tpu_custom_call.1} parent=69 // pred_region
          %vm365 = vcmask 7168
          %366 = vst.msk [vmem:[#allocation2] sm:$0xff] %vm365, -inf
          %367 = vst.msk [vmem:[#allocation3] sm:$0xff] %vm365, 0.0
        $region78: #{tpu_custom_call.1} parent=69 // pred_fallthru
          _
        %v368 = vld [vmem:[%s1] sm:$0xff]
        %s369 = smul.u32 %s22, 2
        %s370 = sadd.s32 %s369, %s23
        %s371 = smul.u32 %s370, 128
        %v372 = vld [vmem:[#allocation2] sm:$0xff]
        %v373 = vld [vmem:[#allocation3] sm:$0xff]
        %v374 = vld [vmem:[%s317] sm:$0xff]
        %v375 = vld [vmem:[%s317 + $0x8] sm:$0xff]
        %v376 = vld [vmem:[%s317 + $0x10] sm:$0xff]
        %v377 = vld [vmem:[%s317 + $0x18] sm:$0xff]
        %v378 = vld [vmem:[%s317 + $0x20] sm:$0xff]
        %v379 = vld [vmem:[%s317 + $0x28] sm:$0xff]
        %v380 = vld [vmem:[%s317 + $0x30] sm:$0xff]
        %v381 = vld [vmem:[%s317 + $0x38] sm:$0xff]
        %v382 = vld [vmem:[%s317 + $0x40] sm:$0xff]
        %v383 = vld [vmem:[%s317 + $0x48] sm:$0xff]
        %v384 = vld [vmem:[%s317 + $0x50] sm:$0xff]
        %v385 = vld [vmem:[%s317 + $0x58] sm:$0xff]
        %v386 = vld [vmem:[%s317 + $0x60] sm:$0xff]
        %v387 = vld [vmem:[%s317 + $0x68] sm:$0xff]
        %v388 = vld [vmem:[%s317 + $0x70] sm:$0xff]
        %v389 = vld [vmem:[%s317 + $0x78] sm:$0xff]
        %390 = vmatprep.subr.mxu0 0.0
        %391 = vmatpush1.msra.mxu0 %v374
        %392 = vmatprep.subr.mxu0 0.0
        %393 = vmatpush1.msra.mxu0 %v375
        %394 = vmatprep.subr.mxu0 0.0
        %395 = vmatpush1.msra.mxu0 %v376
        %396 = vmatprep.subr.mxu0 0.0
        %397 = vmatpush1.msra.mxu0 %v377
        %398 = vmatprep.subr.mxu0 0.0
        %399 = vmatpush1.msra.mxu0 %v378
        %400 = vmatprep.subr.mxu0 0.0
        %401 = vmatpush1.msra.mxu0 %v379
        %402 = vmatprep.subr.mxu0 0.0
        %403 = vmatpush1.msra.mxu0 %v380
        %404 = vmatprep.subr.mxu0 0.0
        %405 = vmatpush1.msra.mxu0 %v381
        %406 = vmatprep.subr.mxu0 0.0
        %407 = vmatpush1.msra.mxu0 %v382
        %408 = vmatprep.subr.mxu0 0.0
        %409 = vmatpush1.msra.mxu0 %v383
        %410 = vmatprep.subr.mxu0 0.0
        %411 = vmatpush1.msra.mxu0 %v384
        %412 = vmatprep.subr.mxu0 0.0
        %413 = vmatpush1.msra.mxu0 %v385
        %414 = vmatprep.subr.mxu0 0.0
        %415 = vmatpush1.msra.mxu0 %v386
        %416 = vmatprep.subr.mxu0 0.0
        %417 = vmatpush1.msra.mxu0 %v387
        %418 = vmatprep.subr.mxu0 0.0
        %419 = vmatpush1.msra.mxu0 %v388
        %420 = vmatprep.subr.mxu0 0.0
        %421 = vmatpush1.msra.mxu0 %v389
        %422 = vmatprep.subr.mxu0 0.0
        %423 = vmatpush1.msra.mxu0 0.0
        %424 = vmatprep.subr.mxu0 0.0
        %425 = vmatpush1.msra.mxu0 0.0
        %426 = vmatprep.subr.mxu0 0.0
        %427 = vmatpush1.msra.mxu0 0.0
        %428 = vmatprep.subr.mxu0 0.0
        %429 = vmatpush1.msra.mxu0 0.0
        %430 = vmatprep.subr.mxu0 0.0
        %431 = vmatpush1.msra.mxu0 0.0
        %432 = vmatprep.subr.mxu0 0.0
        %433 = vmatpush1.msra.mxu0 0.0
        %434 = vmatprep.subr.mxu0 0.0
        %435 = vmatpush1.msra.mxu0 0.0
        %436 = vmatprep.subr.mxu0 0.0
        %437 = vmatpush1.msra.mxu0 0.0
        %438 = vmatprep.subr.mxu0 0.0
        %439 = vmatpush1.msra.mxu0 0.0
        %440 = vmatprep.subr.mxu0 0.0
        %441 = vmatpush1.msra.mxu0 0.0
        %442 = vmatprep.subr.mxu0 0.0
        %443 = vmatpush1.msra.mxu0 0.0
        %444 = vmatprep.subr.mxu0 0.0
        %445 = vmatpush1.msra.mxu0 0.0
        %446 = vmatprep.subr.mxu0 0.0
        %447 = vmatpush1.msra.mxu0 0.0
        %448 = vmatprep.subr.mxu0 0.0
        %449 = vmatpush1.msra.mxu0 0.0
        %450 = vmatprep.subr.mxu0 0.0
        %451 = vmatpush1.msra.mxu0 0.0
        %452 = vmatprep.subr.mxu0 0.0
        %453 = vmatpush1.msra.mxu0 0.0
        %454 = vmatprep.mubr.f32.mxu0 0.0
        %455 = vmatmul.mubr.f32.gmra.mrb[0].mxu0 %v368
        %v456 = vpop.f32.mrb[0].mxu0
        %v457 = vadd.f32 0.0, %v456
        %v458 = vpop.f32.mrb[0].mxu0
        %459 = vdwg.mxu0
        %v460 = vstv %s360
        %v461 = vmul.f32 %v457, %v460
        %v462 = vlaneseq
        %v463 = vand.u32 %v462, 127
        %v464 = vstv %s371
        %v465 = vadd.s32 %v463, %v464
        %v466 = vstv 0
        %v467 = vadd.s32 %v465, %v466
        %vm468 = vcmp.lt.s32.totalorder %v467, 320
        %v469 = vsel %vm468, %v461, -inf
        %470 = vmax.xlane.f32.xlu0 %v469
        %v471 = vpop.xlane.xlu0 %470
        %v472 = vmax.f32 %v372, %v471
        %v473 = vsub.f32 %v372, %v472
        %v474 = vmul.f32 %v473, 1.442695
        %v475 = vpow.pop %v474
        %v476 = vmul.f32 %v373, %v475
        %478 = vset.pattern.permute.xlu0 0
        %479 = vperm.xlu0 %478, %v472
        %v480 = vpop.permute.xlu0 %479
        %v482 = vsub.f32 %v469, %v480
        %v483 = vmul.f32 %v482, 1.442695
        %v484 = vpow.pop %v483
        %485 = vadd.xlane.f32.xlu0 %v484
        %v486 = vpop.xlane.xlu0 %485
        %v487 = vadd.f32 %v476, %v486
        %vm488 = vcmask 7168
        %489 = vst.msk [vmem:[#allocation2] sm:$0xff] %vm488, %v472
        %490 = vst.msk [vmem:[#allocation3] sm:$0xff] %vm488, %v487
        %p491 = scmp.eq.s32.totalorder %s23, 1
        // Predicated region
        $region79: #{tpu_custom_call.1} parent=69 // pred_check
          %p492 = pneg %p491
        $region80: #{tpu_custom_call.1} parent=69 // pred_check_branch
          %494 = sbr.rel (%p492) target = $region82
        $region81: #{tpu_custom_call.1} parent=69 // pred_region
          %v495 = vld [vmem:[%s2] sm:$0xff]
          %v496 = vmul.f32 %v368, %v495
          %497 = vadd.xlane.f32.xlu0 %v496
          %v498 = vpop.xlane.xlu0 %497
          %v499 = vmul.f32 %v498, %v460
          %500 = vst.msk [vmem:[%s356] sm:$0xff] %vm488, %v499
          %v501 = vld [vmem:[#allocation2] sm:$0xff]
          %v502 = vld [vmem:[#allocation3] sm:$0xff]
          %v503 = vlog2.pop %v502
          %v504 = vmul.f32 %v503, 0.6931472
          %v505 = vadd.f32 %v501, %v504
          %506 = vst.msk [vmem:[%s352] sm:$0xff] %vm488, %v505
        $region82: #{tpu_custom_call.1} parent=69 // pred_fallthru
          _
        %p507 = scmp.lt.s32.totalorder %s22, 1
        %s508 = scalar_select %p507, %s22, 1
        %s509 = smul.addr %s508, 8
        %s510 = scalar_lea.vmem %s4, %s509
        %p511 = scmp.lt.s32.totalorder %s22, 1
        %s512 = scalar_select %p511, %s22, 1
        %s513 = smul.addr %s512, 8
        %s514 = scalar_lea.vmem %s5, %s513
        // Predicated region
        $region83: #{tpu_custom_call.1} parent=69 // pred_check
          %p515 = pneg %p145
        $region84: #{tpu_custom_call.1} parent=69 // pred_check_branch
          %517 = sbr.rel (%p515) target = $region86
        $region85: #{tpu_custom_call.1} parent=69 // pred_region
          _
        $region86: #{tpu_custom_call.1} parent=69 // pred_fallthru
          _
        // Predicated region
        $region87: #{tpu_custom_call.1} parent=69 // pred_check
          %p518 = pneg %p171
        $region88: #{tpu_custom_call.1} parent=69 // pred_check_branch
          %520 = sbr.rel (%p518) target = $region90
        $region89: #{tpu_custom_call.1} parent=69 // pred_region
          _
        $region90: #{tpu_custom_call.1} parent=69 // pred_fallthru
          _
      $region70: #{tpu_custom_call.1} parent=5 // pred_fallthru
        _
      %p521 = scmp.le.s32.totalorder 2, %s13
      // Predicated region
      $region91: #{tpu_custom_call.1} parent=5 // pred_check
        %p522 = pneg %p521
      $region92: #{tpu_custom_call.1} parent=5 // pred_check_branch
        %524 = sbr.rel (%p522) target = $region94
      $region93: #{tpu_custom_call.1} parent=5 // pred_region
        %s525 = ssub.s32 %s13, 2
        // Predicated region
        $region95: #{tpu_custom_call.1} parent=93 // pred_check
          %p526 = pneg %p151
        $region96: #{tpu_custom_call.1} parent=93 // pred_check_branch
          %528 = sbr.rel (%p526) target = $region98
        $region97: #{tpu_custom_call.1} parent=93 // pred_region
          %p529 = scmp.lt.s32.totalorder %s24, 1
          %s530 = scalar_select %p529, %s24, 1
          %s531 = smul.addr %s530, 8
          %s532 = scalar_lea.vmem %s4, %s531
        $region98: #{tpu_custom_call.1} parent=93 // pred_fallthru
          _
        // Predicated region
        $region99: #{tpu_custom_call.1} parent=93 // pred_check
          %p533 = pneg %p177
        $region100: #{tpu_custom_call.1} parent=93 // pred_check_branch
          %535 = sbr.rel (%p533) target = $region102
        $region101: #{tpu_custom_call.1} parent=93 // pred_region
          %p536 = scmp.lt.s32.totalorder %s24, 1
          %s537 = scalar_select %p536, %s24, 1
          %s538 = smul.addr %s537, 8
          %s539 = scalar_lea.vmem %s5, %s538
        $region102: #{tpu_custom_call.1} parent=93 // pred_fallthru
          _
      $region94: #{tpu_custom_call.1} parent=5 // pred_fallthru
        _
    $region6: #{tpu_custom_call.1} parent=1 // loop_footer
      %s17 = sadd.s32 1, %s13
    $region7: #{tpu_custom_call.1} parent=1 // loop_footer_branch
      %12 = sbr.rel target = $region3
    $region8: #{tpu_custom_call.1} parent=1 // loop_exit
      _

</llo_original>
